<compile_context>
chip_gen: v7x
topology: tpu7x:2x2x1
jax: 0.10.0
libtpu: 0.0.40
codegen_flags: <defaults>
</compile_context>

<pallas_src>
import functools
import math

import jax
import jax.numpy as jnp
from jax.experimental import pallas as pl
from jax.experimental.pallas import tpu as pltpu


# --------------------------------------------------------------------------
# helpers
# --------------------------------------------------------------------------
def _vmem_limit_bytes():
    """~75% of this chip's VMEM, capped at 100 MiB (v5e/v6e: 96 MiB, v7x: 48 MiB)."""
    cap = 64 << 20  # conservative default (v7x per-TC VMEM)
    try:
        info = pltpu.get_tpu_info()
        cap = int(getattr(info, "vmem_capacity_bytes", cap))
    except Exception:
        pass
    return min((cap * 3) // 4, 100 << 20)


def _pick_tile(n, preferred):
    """Largest power-of-two tile <= preferred that divides n, else the full dim."""
    if n <= preferred:
        return n
    t = 1 << (max(int(preferred), 8).bit_length() - 1)
    while t >= 8:
        if n % t == 0:
            return t
        t //= 2
    return n


# --------------------------------------------------------------------------
# kernel 1: projection  (Wh = h @ W,  f = Wh @ [a1 | a2])
# --------------------------------------------------------------------------
def _gat_project_kernel(h_ref, w_ref, a_ref, wh_ref, f1_ref, f2_ref):
    h = h_ref[...].astype(jnp.bfloat16)           # (tp, F_in)
    w = w_ref[...].astype(jnp.bfloat16)           # (F_in, F_out)
    wh = jnp.dot(h, w, preferred_element_type=jnp.float32)       # (tp, F_out) f32

    # Both attention projections in a single (tiny) MXU matmul: (tp, F_out) @ (F_out, 2)
    f = jnp.dot(wh, a_ref[...], preferred_element_type=jnp.float32)   # (tp, 2)

    wh_ref[...] = wh.astype(wh_ref.dtype)         # bf16, reused by attention @ Wh
    f1_ref[...] = f[:, 0:1]
    f2_ref[...] = f[:, 1:2]


# --------------------------------------------------------------------------
# kernel 2: flash-style masked attention + ELU
# --------------------------------------------------------------------------
def _gat_attention_kernel(f1_ref, f2_ref, adj_ref, wh_ref, out_ref,
                          m_ref, l_ref, acc_ref, *, alpha, concat):
    j = pl.program_id(1)

    @pl.when(j == 0)
    def _():
        m_ref[...] = jnp.full(m_ref.shape, -jnp.inf, m_ref.dtype)
        l_ref[...] = jnp.zeros(l_ref.shape, l_ref.dtype)
        acc_ref[...] = jnp.zeros(acc_ref.shape, acc_ref.dtype)

    # attention logits for this (row-tile, col-tile) block -- all f32 elementwise
    e = f1_ref[...] + f2_ref[...]                         # (tq,1)+(1,tk) -> (tq,tk)
    e = jnp.where(e > 0, e, alpha * e)                    # LeakyReLU(alpha)
    logits = jnp.where(adj_ref[...] > 0, e, -9e15)        # mask non-edges (scalar)

    # online (flash) softmax update
    m_prev = m_ref[...]
    m_new = jnp.maximum(m_prev, jnp.max(logits, axis=1, keepdims=True))
    corr = jnp.exp(m_prev - m_new)                        # exp(-inf)=0 on first step
    p = jnp.exp(logits - m_new)                           # (tq, tk) f32
    l_ref[...] = corr * l_ref[...] + jnp.sum(p, axis=1, keepdims=True)
    acc_ref[...] = corr * acc_ref[...] + jnp.dot(
        p.astype(jnp.bfloat16), wh_ref[...], preferred_element_type=jnp.float32)
    m_ref[...] = m_new

    @pl.when(j == pl.num_programs(1) - 1)
    def _():
        h_prime = acc_ref[...] * pl.reciprocal(l_ref[...], approx=True)
        if concat:
            # ELU(x) = x if x > 0 else expm1(x)
            h_prime = jnp.where(h_prime > 0, h_prime, jnp.expm1(h_prime))
        out_ref[...] = h_prime.astype(out_ref.dtype)


# --------------------------------------------------------------------------
# wrapper
# --------------------------------------------------------------------------
def gat_forward(h, adj, W, a, *, alpha=0.2, concat=True, block_q=256, block_k=512):
    """GAT layer forward.

    h: (N, F_in) f32, adj: (N, N) any dtype (entry > 0 means edge; int8 preferred),
    W: (F_in, F_out) f32, a: (2*F_out, 1) f32.  Returns (N, F_out) f32.
    """
    N, F_in = h.shape
    F_out = W.shape[1]
    alpha = float(alpha)
    concat = bool(concat)

    # adjacency as int8: 4x fewer DMA bytes than f32 on the dominant N^2 stream
    if adj.dtype != jnp.int8:
        adj = (adj > 0).astype(jnp.int8)

    a_cat = jnp.concatenate([a[:F_out, :], a[F_out:, :]], axis=1)  # (F_out, 2)

    vmem_limit = _vmem_limit_bytes()

    # ---- pass 1: Wh (bf16) and attention projections f1, f2 ----
    tp = _pick_tile(N, 256)
    wh, f1, f2 = pl.pallas_call(
        _gat_project_kernel,
        out_shape=(
            jax.ShapeDtypeStruct((N, F_out), jnp.bfloat16),
            jax.ShapeDtypeStruct((N, 1), jnp.float32),
            jax.ShapeDtypeStruct((N, 1), jnp.float32),
        ),
        grid=(N // tp,),
        in_specs=[
            pl.BlockSpec((tp, F_in), lambda i: (i, 0)),
            pl.BlockSpec((F_in, F_out), lambda i: (0, 0)),
            pl.BlockSpec((F_out, 2), lambda i: (0, 0)),
        ],
        out_specs=(
            pl.BlockSpec((tp, F_out), lambda i: (i, 0)),
            pl.BlockSpec((tp, 1), lambda i: (i, 0)),
            pl.BlockSpec((tp, 1), lambda i: (i, 0)),
        ),
        compiler_params=pltpu.CompilerParams(
            dimension_semantics=("parallel",),
            vmem_limit_bytes=vmem_limit,
        ),
    )(h, W, a_cat)

    f2_row = f2.T  # (1, N): lane-contiguous column-tile stream, no in-kernel transpose

    # ---- pass 2: tiled online-softmax attention + attention @ Wh + ELU ----
    tq = _pick_tile(N, block_q)
    tk = _pick_tile(N, block_k)

    kernel = functools.partial(_gat_attention_kernel, alpha=alpha, concat=concat)

    return pl.pallas_call(
        kernel,
        out_shape=jax.ShapeDtypeStruct((N, F_out), jnp.float32),
        grid=(N // tq, N // tk),
        in_specs=[
            pl.BlockSpec((tq, 1), lambda i, j: (i, 0)),      # f1 row tile
            pl.BlockSpec((1, tk), lambda i, j: (0, j)),      # f2 col tile (row vector)
            pl.BlockSpec((tq, tk), lambda i, j: (i, j)),     # adj tile (int8)
            pl.BlockSpec((tk, F_out), lambda i, j: (j, 0)),  # Wh col tile (bf16)
        ],
        out_specs=pl.BlockSpec((tq, F_out), lambda i, j: (i, 0)),
        scratch_shapes=[
            pltpu.VMEM((tq, 1), jnp.float32),       # running row max
            pltpu.VMEM((tq, 1), jnp.float32),       # running row sum
            pltpu.VMEM((tq, F_out), jnp.float32),   # output accumulator
        ],
        compiler_params=pltpu.CompilerParams(
            dimension_semantics=("parallel", "arbitrary"),
            vmem_limit_bytes=vmem_limit,
        ),
    )(f1, f2_row, adj, wh)


# --------------------------------------------------------------------------
# demo / self-check
# --------------------------------------------------------------------------
def _xavier_uniform(key, shape, gain):
    fan_in, fan_out = shape[0], shape[1]
    bound = gain * math.sqrt(6.0 / (fan_in + fan_out))
    return jax.random.uniform(key, shape, jnp.float32, minval=-bound, maxval=bound)


def _run_case(key, N, F_in, F_out, alpha, concat, block_q, block_k):
    k_h, k_adj, k_w, k_a = jax.random.split(key, 4)
    h = jax.random.normal(k_h, (N, F_in), dtype=jnp.float32)
    adj_b = jax.random.uniform(k_adj, (N, N)) > 0.5
    adj_b = jnp.logical_or(adj_b, jnp.eye(N, dtype=bool))   # self-loops
    adj_i8 = adj_b.astype(jnp.int8)

    W = _xavier_uniform(k_w, (F_in, F_out), gain=1.414)
    a = _xavier_uniform(k_a, (2 * F_out, 1), gain=1.414)

    out = gat_forward(h, adj_i8, W, a, alpha=alpha, concat=concat,
                      block_q=block_q, block_k=block_k)
    out = jax.block_until_ready(out)

    # pure-JAX f32 reference (eval mode, dropout no-op)
    Wh = h @ W
    e = Wh @ a[:F_out] + (Wh @ a[F_out:]).T
    e = jnp.where(e > 0, e, alpha * e)
    logits = jnp.where(adj_b, e, -9e15)
    attn = jax.nn.softmax(logits, axis=1)
    ref = attn @ Wh
    if concat:
        ref = jax.nn.elu(ref)

    # bf16 MXU operands + approx reciprocal => compare at bf16-level tolerance
    assert jnp.allclose(out, ref, atol=3e-2, rtol=3e-2), f"mismatch vs reference (N={N})"


if __name__ == "__main__":
    key = jax.random.PRNGKey(0)
    k1, k2 = jax.random.split(key)

    # small single-tile case (matches the module's toy sizes)
    _run_case(k1, N=16, F_in=8, F_out=16, alpha=0.2, concat=True,
              block_q=256, block_k=512)

    # medium case with forced small tiles to exercise the online-softmax
    # multi-tile path (grid = (2, 2))
    _run_case(k2, N=256, F_in=32, F_out=64, alpha=0.2, concat=True,
              block_q=128, block_k=128)

    print("KERNEL_OK")
</pallas_src>

<mosaic_0001>
module attributes {stable_mosaic.version = 11 : i64} {
  func.func @_gat_project_kernel(%arg0: i32, %arg1: memref<16x8xf32, #tpu.memory_space<vmem>>, %arg2: memref<8x16xf32, #tpu.memory_space<vmem>>, %arg3: memref<16x2xf32, #tpu.memory_space<vmem>>, %arg4: memref<16x16xbf16, #tpu.memory_space<vmem>>, %arg5: memref<16x1xf32, #tpu.memory_space<vmem>>, %arg6: memref<16x1xf32, #tpu.memory_space<vmem>>) attributes {dimension_semantics = [#tpu.dimension_semantics<parallel>], iteration_bounds = array<i64: 1>, scalar_prefetch = 0 : i64, scratch_operands = 0 : i64, tpu.core_type = #tpu.core_type<tc>, window_params = [{transform_indices = @transform_0, window_bounds = array<i64: 16, 8>}, {pipeline_mode = #tpu.pipeline_mode<synchronous>, transform_indices = @transform_1, window_bounds = array<i64: 8, 16>}, {pipeline_mode = #tpu.pipeline_mode<synchronous>, transform_indices = @transform_2, window_bounds = array<i64: 16, 2>}, {transform_indices = @transform_3, window_bounds = array<i64: 16, 16>}, {transform_indices = @transform_4, window_bounds = array<i64: 16, 1>}, {transform_indices = @transform_5, window_bounds = array<i64: 16, 1>}]} {
    %c0 = arith.constant 0 : index
    %c0_0 = arith.constant 0 : index
    %0 = vector.load %arg1[%c0, %c0_0] : memref<16x8xf32, #tpu.memory_space<vmem>>, vector<16x8xf32>
    %1 = arith.truncf %0 : vector<16x8xf32> to vector<16x8xbf16>
    %c0_1 = arith.constant 0 : index
    %c0_2 = arith.constant 0 : index
    %2 = vector.load %arg2[%c0_1, %c0_2] : memref<8x16xf32, #tpu.memory_space<vmem>>, vector<8x16xf32>
    %3 = arith.truncf %2 : vector<8x16xf32> to vector<8x16xbf16>
    %cst = arith.constant dense<0.000000e+00> : vector<16x16xf32>
    %4 = tpu.matmul %1, %3, %cst {dimension_numbers = #tpu.dot_dimension_numbers<[1], [0], [0], [1], [0, 0, 1, 1], [], []>} : vector<16x8xbf16>, vector<8x16xbf16>, vector<16x16xf32> -> vector<16x16xf32>
    %c0_3 = arith.constant 0 : index
    %c0_4 = arith.constant 0 : index
    %5 = vector.load %arg3[%c0_3, %c0_4] : memref<16x2xf32, #tpu.memory_space<vmem>>, vector<16x2xf32>
    %cst_5 = arith.constant dense<0.000000e+00> : vector<16x2xf32>
    %6 = tpu.matmul %4, %5, %cst_5 {dimension_numbers = #tpu.dot_dimension_numbers<[1], [0], [0], [1], [0, 0, 1, 1], [], []>} : vector<16x16xf32>, vector<16x2xf32>, vector<16x2xf32> -> vector<16x2xf32>
    %7 = arith.truncf %4 : vector<16x16xf32> to vector<16x16xbf16>
    %c0_6 = arith.constant 0 : index
    %c0_7 = arith.constant 0 : index
    %8 = vector.load %arg4[%c0_6, %c0_7] : memref<16x16xbf16, #tpu.memory_space<vmem>>, vector<16x16xbf16>
    tpu.vector_store %arg4[%c0_6, %c0_7], %7 {strides = array<i32>} : memref<16x16xbf16, #tpu.memory_space<vmem>>, vector<16x16xbf16>,
    %9 = vector.extract_strided_slice %6 {offsets = [0, 0], sizes = [16, 1], strides = [1, 1]} : vector<16x2xf32> to vector<16x1xf32>
    %c0_8 = arith.constant 0 : index
    %c0_9 = arith.constant 0 : index
    %10 = vector.load %arg5[%c0_8, %c0_9] : memref<16x1xf32, #tpu.memory_space<vmem>>, vector<16x1xf32>
    tpu.vector_store %arg5[%c0_8, %c0_9], %9 {strides = array<i32>} : memref<16x1xf32, #tpu.memory_space<vmem>>, vector<16x1xf32>,
    %11 = vector.extract_strided_slice %6 {offsets = [0, 1], sizes = [16, 1], strides = [1, 1]} : vector<16x2xf32> to vector<16x1xf32>
    %c0_10 = arith.constant 0 : index
    %c0_11 = arith.constant 0 : index
    %12 = vector.load %arg6[%c0_10, %c0_11] : memref<16x1xf32, #tpu.memory_space<vmem>>, vector<16x1xf32>
    tpu.vector_store %arg6[%c0_10, %c0_11], %11 {strides = array<i32>} : memref<16x1xf32, #tpu.memory_space<vmem>>, vector<16x1xf32>,
    return
  }
  func.func @transform_0(%arg0: i32) -> (i32, i32) {
    %c0_i32 = arith.constant 0 : i32
    %c0_i32_0 = arith.constant 0 : i32
    return %arg0, %c0_i32 : i32, i32
  }
  func.func @transform_1(%arg0: i32) -> (i32, i32) {
    %c0_i32 = arith.constant 0 : i32
    %c0_i32_0 = arith.constant 0 : i32
    %c0_i32_1 = arith.constant 0 : i32
    return %c0_i32, %c0_i32_0 : i32, i32
  }
  func.func @transform_2(%arg0: i32) -> (i32, i32) {
    %c0_i32 = arith.constant 0 : i32
    %c0_i32_0 = arith.constant 0 : i32
    %c0_i32_1 = arith.constant 0 : i32
    return %c0_i32, %c0_i32_0 : i32, i32
  }
  func.func @transform_3(%arg0: i32) -> (i32, i32) {
    %c0_i32 = arith.constant 0 : i32
    %c0_i32_0 = arith.constant 0 : i32
    return %arg0, %c0_i32 : i32, i32
  }
  func.func @transform_4(%arg0: i32) -> (i32, i32) {
    %c0_i32 = arith.constant 0 : i32
    %c0_i32_0 = arith.constant 0 : i32
    return %arg0, %c0_i32 : i32, i32
  }
  func.func @transform_5(%arg0: i32) -> (i32, i32) {
    %c0_i32 = arith.constant 0 : i32
    %c0_i32_0 = arith.constant 0 : i32
    return %arg0, %c0_i32 : i32, i32
  }
}

</mosaic_0001>

<llo_original>
// kernel: tpu_custom_call.1
$region0: #{tpu_custom_call.1}
  #allocation0 [shape = 'u32[]', space=smem, size = 0x4, offset = 0x4, fixed_abs, tag = 'smem constant byte address 0x4 - core index']
  #allocation1 [shape = 'u32[144,128]{1,0:T(1,128)}', space=vmem, size = 0x12000, scoped, tag = 'internal scratch']
  %s0 = inlined_call_operand.vmem [shape: f32[16,8], index: 0, kind: input, shape index: {}]
  %s1 = inlined_call_operand.vmem [shape: f32[8,16], index: 1, kind: input, shape index: {}]
  %s2 = inlined_call_operand.vmem [shape: f32[16,2], index: 2, kind: input, shape index: {}]
  %s3 = inlined_call_operand.hbm [shape: bf16[16,16], index: 3, kind: output, shape index: {0}]
  %s4 = inlined_call_operand.vmem [shape: f32[16,1], index: 4, kind: output, shape index: {1}]
  %s5 = inlined_call_operand.vmem [shape: f32[16,1], index: 5, kind: output, shape index: {2}]
  %6 = xla_tuple %s3, %s4, %s5
  %s7 = sld [smem:[#allocation0]]
  $region38: #{tpu_custom_call.1} parent=0
    _
  %s9 = ssub.s32 1, %s7
  %s10 = scalar_select 0, %s9, %s7
  $region1: #{tpu_custom_call.1} parent=0
    #allocation2 [shape = 'u8[4096]{0}', space=vmem, size = 0x1000, scoped, tag = 'output window, operand 0, single buffered']
    #allocation3 [shape = 's32[1]{0}', space=sflag, size = 0x4, scoped, tag = 'scoped memory for tpu_custom_call.1']
    %11 = vsyncpa [#allocation3], 0
    // Predicated region
    $region2: #{tpu_custom_call.1} parent=1 // pred_check
      _
    $region3: #{tpu_custom_call.1} parent=1 // pred_check_branch
      %13 = sbr.rel (0) target = $region5
    $region4: #{tpu_custom_call.1} parent=1 // pred_region
      _
    $region5: #{tpu_custom_call.1} parent=1 // pred_fallthru
      _
    // Predicated region
    $region6: #{tpu_custom_call.1} parent=1 // pred_check
      _
    $region7: #{tpu_custom_call.1} parent=1 // pred_check_branch
      %15 = sbr.rel (0) target = $region9
    $region8: #{tpu_custom_call.1} parent=1 // pred_region
      _
    $region9: #{tpu_custom_call.1} parent=1 // pred_fallthru
      _
    // Predicated region
    $region10: #{tpu_custom_call.1} parent=1 // pred_check
      _
    $region11: #{tpu_custom_call.1} parent=1 // pred_check_branch
      %17 = sbr.rel (0) target = $region13
    $region12: #{tpu_custom_call.1} parent=1 // pred_region
      _
    $region13: #{tpu_custom_call.1} parent=1 // pred_fallthru
      _
    %v19 = vld [vmem:[%s0] sm:$0xff]
    %v20 = vld [vmem:[%s0 + $0x8] sm:$0xff]
    %v21 = vpack.c.bf16 %v20, %v19
    %v22 = vld [vmem:[%s1] sm:$0xff]
    %v23 = vpack.c.bf16 %v22, %v22
    %vm24 = vcmask 64512
    %v26 = vsel %vm24, %v21, 0
    %vm28 = vcmask 1043456
    %v30 = vsel %vm28, %v23, 0
    %32 = vmatprep.subr.bf16.mxu0 0
    %33 = vmatpush1.bf16.msra.mxu0 %v30
    %34 = vmatprep.subr.bf16.mxu0 0
    %35 = vmatpush1.bf16.msra.mxu0 0
    %36 = vmatprep.subr.bf16.mxu0 0
    %37 = vmatpush1.bf16.msra.mxu0 0
    %38 = vmatprep.subr.bf16.mxu0 0
    %39 = vmatpush1.bf16.msra.mxu0 0
    %40 = vmatprep.subr.bf16.mxu0 0
    %41 = vmatpush1.bf16.msra.mxu0 0
    %42 = vmatprep.subr.bf16.mxu0 0
    %43 = vmatpush1.bf16.msra.mxu0 0
    %44 = vmatprep.subr.bf16.mxu0 0
    %45 = vmatpush1.bf16.msra.mxu0 0
    %46 = vmatprep.subr.bf16.mxu0 0
    %47 = vmatpush1.bf16.msra.mxu0 0
    %48 = vmatprep.subr.bf16.mxu0 0
    %49 = vmatpush1.bf16.msra.mxu0 0
    %50 = vmatprep.subr.bf16.mxu0 0
    %51 = vmatpush1.bf16.msra.mxu0 0
    %52 = vmatprep.subr.bf16.mxu0 0
    %53 = vmatpush1.bf16.msra.mxu0 0
    %54 = vmatprep.subr.bf16.mxu0 0
    %55 = vmatpush1.bf16.msra.mxu0 0
    %56 = vmatprep.subr.bf16.mxu0 0
    %57 = vmatpush1.bf16.msra.mxu0 0
    %58 = vmatprep.subr.bf16.mxu0 0
    %59 = vmatpush1.bf16.msra.mxu0 0
    %60 = vmatprep.subr.bf16.mxu0 0
    %61 = vmatpush1.bf16.msra.mxu0 0
    %62 = vmatprep.subr.bf16.mxu0 0
    %63 = vmatpush1.bf16.msra.mxu0 0
    %64 = vmatprep.mubr.bf16.mxu0 0
    %65 = vmatmul.mubr.bf16.gmra.mrb[0].mxu0 %v26
    %v66 = vpop.f32.mrb[0].mxu0
    %v67 = vadd.f32 0.0, %v66
    %v68 = vpop.f32.mrb[0].mxu0
    %v69 = vpop.f32.mrb[0].mxu0
    %v70 = vadd.f32 0.0, %v69
    %v71 = vpop.f32.mrb[0].mxu0
    %72 = vdwg.mxu0
    %v73 = vld [vmem:[%s2] sm:$0xff]
    %v74 = vld [vmem:[%s2 + $0x8] sm:$0xff]
    %vm75 = vcmask 130048
    %v77 = vsel %vm75, %v67, 0
    %v80 = vsel %vm75, %v70, 0
    %82 = vmatprep.subr.mxu0 0.0
    %83 = vmatpush1.msra.mxu0 %v73
    %84 = vmatprep.subr.mxu0 0.0
    %85 = vmatpush1.msra.mxu0 %v74
    %86 = vmatprep.subr.mxu0 0.0
    %87 = vmatpush1.msra.mxu0 0.0
    %88 = vmatprep.subr.mxu0 0.0
    %89 = vmatpush1.msra.mxu0 0.0
    %90 = vmatprep.subr.mxu0 0.0
    %91 = vmatpush1.msra.mxu0 0.0
    %92 = vmatprep.subr.mxu0 0.0
    %93 = vmatpush1.msra.mxu0 0.0
    %94 = vmatprep.subr.mxu0 0.0
    %95 = vmatpush1.msra.mxu0 0.0
    %96 = vmatprep.subr.mxu0 0.0
    %97 = vmatpush1.msra.mxu0 0.0
    %98 = vmatprep.subr.mxu0 0.0
    %99 = vmatpush1.msra.mxu0 0.0
    %100 = vmatprep.subr.mxu0 0.0
    %101 = vmatpush1.msra.mxu0 0.0
    %102 = vmatprep.subr.mxu0 0.0
    %103 = vmatpush1.msra.mxu0 0.0
    %104 = vmatprep.subr.mxu0 0.0
    %105 = vmatpush1.msra.mxu0 0.0
    %106 = vmatprep.subr.mxu0 0.0
    %107 = vmatpush1.msra.mxu0 0.0
    %108 = vmatprep.subr.mxu0 0.0
    %109 = vmatpush1.msra.mxu0 0.0
    %110 = vmatprep.subr.mxu0 0.0
    %111 = vmatpush1.msra.mxu0 0.0
    %112 = vmatprep.subr.mxu0 0.0
    %113 = vmatpush1.msra.mxu0 0.0
    %114 = vmatprep.subr.mxu0 0.0
    %115 = vmatpush1.msra.mxu0 0.0
    %116 = vmatprep.subr.mxu0 0.0
    %117 = vmatpush1.msra.mxu0 0.0
    %118 = vmatprep.subr.mxu0 0.0
    %119 = vmatpush1.msra.mxu0 0.0
    %120 = vmatprep.subr.mxu0 0.0
    %121 = vmatpush1.msra.mxu0 0.0
    %122 = vmatprep.subr.mxu0 0.0
    %123 = vmatpush1.msra.mxu0 0.0
    %124 = vmatprep.subr.mxu0 0.0
    %125 = vmatpush1.msra.mxu0 0.0
    %126 = vmatprep.subr.mxu0 0.0
    %127 = vmatpush1.msra.mxu0 0.0
    %128 = vmatprep.subr.mxu0 0.0
    %129 = vmatpush1.msra.mxu0 0.0
    %130 = vmatprep.subr.mxu0 0.0
    %131 = vmatpush1.msra.mxu0 0.0
    %132 = vmatprep.subr.mxu0 0.0
    %133 = vmatpush1.msra.mxu0 0.0
    %134 = vmatprep.subr.mxu0 0.0
    %135 = vmatpush1.msra.mxu0 0.0
    %136 = vmatprep.subr.mxu0 0.0
    %137 = vmatpush1.msra.mxu0 0.0
    %138 = vmatprep.subr.mxu0 0.0
    %139 = vmatpush1.msra.mxu0 0.0
    %140 = vmatprep.subr.mxu0 0.0
    %141 = vmatpush1.msra.mxu0 0.0
    %142 = vmatprep.subr.mxu0 0.0
    %143 = vmatpush1.msra.mxu0 0.0
    %144 = vmatprep.subr.mxu0 0.0
    %145 = vmatpush1.msra.mxu0 0.0
    %146 = vmatprep.mubr.f32.mxu0 0.0
    %147 = vmatmul.mubr.f32.gmra.mrb[0].mxu0 %v77
    %v148 = vpop.f32.mrb[0].mxu0
    %v149 = vadd.f32 0.0, %v148
    %v150 = vpop.f32.mrb[0].mxu0
    %151 = vmatprep.mubr.f32.mxu0 0.0
    %152 = vmatmul.mubr.f32.gmra.mrb[0].mxu0 %v80
    %v153 = vpop.f32.mrb[0].mxu0
    %v154 = vadd.f32 0.0, %v153
    %v155 = vpop.f32.mrb[0].mxu0
    %156 = vdwg.mxu0
    %v157 = vpack.c.bf16 %v70, %v67
    %v159 = vunpack.c.l.b16 %v157
    %v160 = vunpack.c.h.b16 %v157
    %v161 = vpack.c.b16 %v159, %v159
    %v162 = vpack.c.b16 %v160, %v160
    %vm165 = vcmask 125952
    %166 = vst.msk [vmem:[#allocation2] sm:$0xf] %vm165, %v161
    %167 = vst.msk [vmem:[#allocation2 + $0x4] sm:$0xf] %vm165, %v162
    %vm168 = vcmask 7168
    %169 = vst.msk [vmem:[%s4] sm:$0xff] %vm168, %v149
    %170 = vst.msk [vmem:[%s4 + $0x8] sm:$0xff] %vm168, %v154
    %173 = vrot.lane.b32.xlu0 %v149, 127
    %v174 = vpop.permute.xlu0 %173
    %175 = vrot.lane.b32.xlu0 %v154, 127
    %v176 = vpop.permute.xlu0 %175
    %179 = vst.msk [vmem:[%s5] sm:$0xff] %vm168, %v174
    %180 = vst.msk [vmem:[%s5 + $0x8] sm:$0xff] %vm168, %v176
    // Predicated region
    $region14: #{tpu_custom_call.1} parent=1 // pred_check
      _
    $region15: #{tpu_custom_call.1} parent=1 // pred_check_branch
      %182 = sbr.rel (0) target = $region17
    $region16: #{tpu_custom_call.1} parent=1 // pred_region
      %s184 = ssub.s32 128, 128
      %185 = vsyncadd [#allocation3], %s184
      %s186 = sshll.u32 [#allocation2], 4
      %s187 = int_to_ptr.vmem [resolvable:$true] %s186
      %192 = dma.vmem_to_hbm [thread:$0]  %s187, 128, %s3, [#allocation3], 64, 64, 4
    $region17: #{tpu_custom_call.1} parent=1 // pred_fallthru
      _
    // Predicated region
    $region18: #{tpu_custom_call.1} parent=1 // pred_check
      _
    $region19: #{tpu_custom_call.1} parent=1 // pred_check_branch
      %194 = sbr.rel (0) target = $region21
    $region20: #{tpu_custom_call.1} parent=1 // pred_region
      _
    $region21: #{tpu_custom_call.1} parent=1 // pred_fallthru
      _
    // Predicated region
    $region22: #{tpu_custom_call.1} parent=1 // pred_check
      _
    $region23: #{tpu_custom_call.1} parent=1 // pred_check_branch
      %196 = sbr.rel (0) target = $region25
    $region24: #{tpu_custom_call.1} parent=1 // pred_region
      _
    $region25: #{tpu_custom_call.1} parent=1 // pred_fallthru
      _
    // Predicated region
    $region26: #{tpu_custom_call.1} parent=1 // pred_check
      _
    $region27: #{tpu_custom_call.1} parent=1 // pred_check_branch
      %198 = sbr.rel (0) target = $region29
    $region28: #{tpu_custom_call.1} parent=1 // pred_region
      %199 = dma.done [#allocation3], 128
    $region29: #{tpu_custom_call.1} parent=1 // pred_fallthru
      _
    // Predicated region
    $region30: #{tpu_custom_call.1} parent=1 // pred_check
      _
    $region31: #{tpu_custom_call.1} parent=1 // pred_check_branch
      %201 = sbr.rel (0) target = $region33
    $region32: #{tpu_custom_call.1} parent=1 // pred_region
      _
    $region33: #{tpu_custom_call.1} parent=1 // pred_fallthru
      _
    // Predicated region
    $region34: #{tpu_custom_call.1} parent=1 // pred_check
      _
    $region35: #{tpu_custom_call.1} parent=1 // pred_check_branch
      %203 = sbr.rel (0) target = $region37
    $region36: #{tpu_custom_call.1} parent=1 // pred_region
      _
    $region37: #{tpu_custom_call.1} parent=1 // pred_fallthru
      _
    %204 = vsyncpa [#allocation3], 1

</llo_original>
